<compile_context>
chip_gen: v5e
topology: v5e:2x2
jax: 0.10.0
libtpu: 0.0.40
codegen_flags: <defaults>
</compile_context>

<pallas_src>
import jax
import jax.numpy as jnp
from jax.experimental import pallas as pl
from jax.experimental.pallas import tpu as pltpu


def _conv1x1_bn_relu_kernel(x_ref, w_ref, b_ref, o_ref):
    # x_ref: (Cin, TL)   spatial-on-lanes slab of one image (compute dtype, e.g. bf16)
    # w_ref: (TN, Cin)   BN-folded 1x1 conv weights (compute dtype)
    # b_ref: (TN, 1)     BN-folded bias (f32, broadcast over lanes)
    # o_ref: (TN, TL)
    y = jnp.dot(w_ref[...], x_ref[...], preferred_element_type=jnp.float32)
    y = y + b_ref[...]
    o_ref[...] = jnp.maximum(y, 0.0).astype(o_ref.dtype)


def conv_bn_relu(x_nchw, weight, bias, gamma, beta, running_mean, running_var,
                 eps=1e-5, compute_dtype=jnp.bfloat16,
                 max_lane_tile=None, max_cout_tile=256):
    """x_nchw: (N, Cin, H, W). weight: (Cout, Cin, 1, 1) (nn.Conv2d kernel).
    Returns (N, Cout, H, W) == relu(bn(conv(x))) with eval-mode BN."""
    N, Cin, H, W = x_nchw.shape
    Cout = weight.shape[0]
    HW = H * W
    out_dtype = x_nchw.dtype

    # ---- Generation-aware VMEM budget / tile caps ----
    try:
        phys_vmem = int(pltpu.get_tpu_info().vmem_capacity_bytes)
    except Exception:
        phys_vmem = 64 * 2 ** 20  # conservative (v7x per-TC)
    vmem_cap = (phys_vmem * 3) // 4          # ~48 MiB on 64-MiB parts, ~96 MiB on 128-MiB parts
    if max_lane_tile is None:
        max_lane_tile = 4096 if phys_vmem >= 100 * 2 ** 20 else 2048

    # ---- Fold BN (running stats) + conv bias into weight/bias, in float32 ----
    scale = (gamma.astype(jnp.float32)
             * jax.lax.rsqrt(running_var.astype(jnp.float32) + eps))          # (Cout,)
    w2d = weight.reshape(Cout, Cin).astype(jnp.float32)
    w_folded = (w2d * scale[:, None]).astype(compute_dtype)                   # (Cout, Cin)
    b_folded = ((bias.astype(jnp.float32) - running_mean.astype(jnp.float32))
                * scale + beta.astype(jnp.float32)).reshape(Cout, 1)          # (Cout, 1) f32

    # ---- Layout: keep NCHW, free reshape so spatial is the lane axis; cast heavy stream ----
    x3d = x_nchw.reshape(N, Cin, HW).astype(compute_dtype)

    # Tiles: full dim if it fits (always layout-legal), otherwise the (128/8)-aligned cap.
    tl = HW if HW <= max_lane_tile else max_lane_tile      # lane (spatial) tile
    tn = Cout if Cout <= max_cout_tile else max_cout_tile  # output-channel tile
    n_s = pl.cdiv(HW, tl)
    n_j = pl.cdiv(Cout, tn)
    # Cout-tile axis innermost so the x slab stays resident (only tiny W/b re-fetched).
    grid = (N, n_s, n_j)

    in_sz = jnp.dtype(compute_dtype).itemsize
    out_sz = jnp.dtype(out_dtype).itemsize

    # Double-buffered per-block footprint -> explicit VMEM limit (with headroom under cap).
    vmem_need = (2 * Cin * tl * in_sz          # x slab
                 + 2 * tn * Cin * in_sz        # folded W
                 + 2 * tn * 1 * 4              # folded bias (f32)
                 + 2 * tn * tl * out_sz)       # output tile
    vmem_limit = int(min(vmem_cap, max(2 * vmem_need, 32 * 2 ** 20)))

    cost = pl.CostEstimate(
        flops=2 * N * HW * Cin * Cout,
        transcendentals=0,
        bytes_accessed=(in_sz * (N * Cin * HW + Cout * Cin)
                        + 4 * Cout
                        + out_sz * N * Cout * HW),
    )

    out3d = pl.pallas_call(
        _conv1x1_bn_relu_kernel,
        out_shape=jax.ShapeDtypeStruct((N, Cout, HW), out_dtype),
        grid_spec=pltpu.PrefetchScalarGridSpec(
            num_scalar_prefetch=0,
            grid=grid,
            in_specs=[
                pl.BlockSpec((None, Cin, tl), lambda n, s, j: (n, 0, s)),  # x slab (const in j)
                pl.BlockSpec((tn, Cin), lambda n, s, j: (j, 0)),           # folded W
                pl.BlockSpec((tn, 1), lambda n, s, j: (j, 0)),             # folded b
            ],
            out_specs=pl.BlockSpec((None, tn, tl), lambda n, s, j: (n, j, s)),
        ),
        compiler_params=pltpu.CompilerParams(
            dimension_semantics=("parallel", "parallel", "parallel"),
            vmem_limit_bytes=vmem_limit,
        ),
        cost_estimate=cost,
    )(x3d, w_folded, b_folded)

    return out3d.reshape(N, Cout, H, W)


if __name__ == "__main__":
    key = jax.random.PRNGKey(0)
    kx, kw, kb, kg, kbe, km, kv = jax.random.split(key, 7)

    # Small shapes consistent with the module
    N, Cin, Cout, H, W = 2, 4, 8, 16, 16
    eps = 1e-5

    x = jax.random.normal(kx, (N, Cin, H, W), dtype=jnp.float32)

    # Deterministic synthetic parameters (shapes from nn.Conv2d / nn.BatchNorm2d)
    weight = jax.random.normal(kw, (Cout, Cin, 1, 1), dtype=jnp.float32) * 0.1
    bias = jax.random.normal(kb, (Cout,), dtype=jnp.float32) * 0.1
    gamma = 1.0 + 0.1 * jax.random.normal(kg, (Cout,), dtype=jnp.float32)
    beta = 0.1 * jax.random.normal(kbe, (Cout,), dtype=jnp.float32)
    running_mean = 0.1 * jax.random.normal(km, (Cout,), dtype=jnp.float32)
    running_var = jnp.abs(1.0 + 0.1 * jax.random.normal(kv, (Cout,), dtype=jnp.float32))

    out = conv_bn_relu(x, weight, bias, gamma, beta, running_mean, running_var, eps=eps)
    out = jax.block_until_ready(out)

    # Pure-JAX f32 reference (eval-mode BatchNorm semantics, unfolded)
    w2 = weight[:, :, 0, 0]
    conv_ref = jnp.einsum("nchw,oc->nohw", x, w2) + bias[None, :, None, None]
    bn_ref = (conv_ref - running_mean[None, :, None, None]) \
        / jnp.sqrt(running_var[None, :, None, None] + eps) \
        * gamma[None, :, None, None] + beta[None, :, None, None]
    ref = jnp.maximum(bn_ref, 0.0)

    assert out.shape == (N, Cout, H, W)
    # bf16 heavy streams (per perf review) -> compare against the f32 reference with a
    # tolerance that comfortably covers bf16 input rounding (accumulation stays f32).
    assert jnp.allclose(out, ref, atol=3e-2, rtol=3e-2), "mismatch vs reference"
    print("KERNEL_OK")
</pallas_src>

<mosaic_0001>
module attributes {stable_mosaic.version = 11 : i64} {
  func.func @_conv1x1_bn_relu_kernel(%arg0: i32, %arg1: i32, %arg2: i32, %arg3: memref<1x4x256xbf16, #tpu.memory_space<vmem>>, %arg4: memref<8x4xbf16, #tpu.memory_space<vmem>>, %arg5: memref<8x1xf32, #tpu.memory_space<vmem>>, %arg6: memref<1x8x256xf32, #tpu.memory_space<vmem>>) attributes {dimension_semantics = [#tpu.dimension_semantics<parallel>, #tpu.dimension_semantics<parallel>, #tpu.dimension_semantics<parallel>], iteration_bounds = array<i64: 2, 1, 1>, scalar_prefetch = 0 : i64, scratch_operands = 0 : i64, tpu.core_type = #tpu.core_type<tc>, window_params = [{transform_indices = @transform_0, window_bounds = array<i64: 1, 4, 256>}, {transform_indices = @transform_1, window_bounds = array<i64: 8, 4>}, {transform_indices = @transform_2, window_bounds = array<i64: 8, 1>}, {transform_indices = @transform_3, window_bounds = array<i64: 1, 8, 256>}]} {
    %c0 = arith.constant 0 : index
    %c0_0 = arith.constant 0 : index
    %0 = vector.load %arg4[%c0, %c0_0] : memref<8x4xbf16, #tpu.memory_space<vmem>>, vector<8x4xbf16>
    %c0_1 = arith.constant 0 : index
    %c0_2 = arith.constant 0 : index
    %c0_3 = arith.constant 0 : index
    %1 = vector.load %arg3[%c0_1, %c0_2, %c0_3] : memref<1x4x256xbf16, #tpu.memory_space<vmem>>, vector<1x4x256xbf16>
    %2 = vector.shape_cast %1 : vector<1x4x256xbf16> to vector<4x256xbf16>
    %cst = arith.constant dense<0.000000e+00> : vector<8x256xf32>
    %3 = tpu.matmul %0, %2, %cst {dimension_numbers = #tpu.dot_dimension_numbers<[1], [0], [0], [1], [0, 0, 1, 1], [], []>} : vector<8x4xbf16>, vector<4x256xbf16>, vector<8x256xf32> -> vector<8x256xf32>
    %c0_4 = arith.constant 0 : index
    %c0_5 = arith.constant 0 : index
    %4 = vector.load %arg5[%c0_4, %c0_5] : memref<8x1xf32, #tpu.memory_space<vmem>>, vector<8x1xf32>
    %5 = vector.broadcast %4 : vector<8x1xf32> to vector<8x256xf32>
    %6 = arith.addf %3, %5 : vector<8x256xf32>
    %cst_6 = arith.constant 0.000000e+00 : f32
    %7 = vector.broadcast %cst_6 : f32 to vector<8x256xf32>
    %8 = arith.maximumf %6, %7 : vector<8x256xf32>
    %c0_7 = arith.constant 0 : index
    %c0_8 = arith.constant 0 : index
    %c0_9 = arith.constant 0 : index
    %9 = vector.load %arg6[%c0_7, %c0_8, %c0_9] : memref<1x8x256xf32, #tpu.memory_space<vmem>>, vector<1x8x256xf32>
    %10 = vector.shape_cast %9 : vector<1x8x256xf32> to vector<8x256xf32>
    %11 = vector.shape_cast %8 : vector<8x256xf32> to vector<1x8x256xf32>
    tpu.vector_store %arg6[%c0_7, %c0_8, %c0_9], %11 {strides = array<i32>} : memref<1x8x256xf32, #tpu.memory_space<vmem>>, vector<1x8x256xf32>,
    return
  }
  func.func @transform_0(%arg0: i32, %arg1: i32, %arg2: i32) -> (i32, i32, i32) {
    %c0_i32 = arith.constant 0 : i32
    %c0_i32_0 = arith.constant 0 : i32
    return %arg0, %c0_i32, %arg1 : i32, i32, i32
  }
  func.func @transform_1(%arg0: i32, %arg1: i32, %arg2: i32) -> (i32, i32) {
    %c0_i32 = arith.constant 0 : i32
    %c0_i32_0 = arith.constant 0 : i32
    return %arg2, %c0_i32 : i32, i32
  }
  func.func @transform_2(%arg0: i32, %arg1: i32, %arg2: i32) -> (i32, i32) {
    %c0_i32 = arith.constant 0 : i32
    %c0_i32_0 = arith.constant 0 : i32
    return %arg2, %c0_i32 : i32, i32
  }
  func.func @transform_3(%arg0: i32, %arg1: i32, %arg2: i32) -> (i32, i32, i32) {
    %c0_i32 = arith.constant 0 : i32
    return %arg0, %arg2, %arg1 : i32, i32, i32
  }
}

</mosaic_0001>

<llo_original>
// kernel: tpu_custom_call.1
$region0: #{tpu_custom_call.1}
  #allocation0 [shape = 'u32[]', space=smem, size = 0x4, offset = 0x4, fixed_abs, tag = 'smem constant byte address 0x4 - core index']
  #allocation1 [shape = 'u32[72,128]{1,0:T(1,128)}', space=vmem, size = 0x9000, scoped, tag = 'internal scratch']
  %s0 = inlined_call_operand.vmem [shape: bf16[2,4,256], index: 0, kind: input, shape index: {}]
  %s1 = inlined_call_operand.vmem [shape: bf16[8,4], index: 1, kind: input, shape index: {}]
  %s2 = inlined_call_operand.vmem [shape: f32[8,1], index: 2, kind: input, shape index: {}]
  %s3 = inlined_call_operand.hbm [shape: f32[2,8,256], index: 3, kind: output, shape index: {}]
  %s4 = sld [smem:[#allocation0]]
  $region45: #{tpu_custom_call.1} parent=0
    _
  %s6 = ssub.s32 1, %s4
  %s7 = scalar_select 0, %s6, %s4
  $region1: #{tpu_custom_call.1} parent=0
    #allocation2 [shape = 'u8[16384]{0}', space=vmem, size = 0x4000, scoped, tag = 'output window, operand 0']
    #allocation3 [shape = 's32[2]{0}', space=sflag, size = 0x8, scoped, tag = 'scoped memory for tpu_custom_call.1']
    %8 = vsyncpa [#allocation3], 0
    %s9 = scalar_lea.sflag [#allocation3], 1
    %10 = vsyncpa %s9, 0
    loop: start=0, step=1, limit=4
    $region2: #{tpu_custom_call.1} parent=1 // loop_pre_header
      _
    $region3: #{tpu_custom_call.1} parent=1 // loop_header
      %s12 = sphi 0, %s16
      %p13 = scmp.ge.s32.totalorder %s12, 4
      %s19 = sphi 0, %s38
      %s20 = sphi 0, %s34
      %s21 = sphi 0, %s30
      %s22 = sphi 0, %s19
      %s23 = sphi 0, %s20
      %s24 = sphi 0, %s21
      %s25 = sphi 0, %s22
      %s26 = sphi 0, %s23
      %s27 = sphi 0, %s24
      %s43 = sphi 0, %s45
      %s46 = sphi 0, %s43
      %s47 = sphi 0, %s46
      %s63 = sphi 0, %s47
      %s69 = sphi 0, %s71
      %s72 = sphi 0, %s69
      %s73 = sphi 0, %s72
      %s89 = sphi 0, %s73
      %s95 = sphi 0, %s97
      %s98 = sphi 0, %s95
      %s99 = sphi 0, %s98
      %s115 = sphi 0, %s99
      %s125 = sphi 0, %s127
      %s128 = sphi 0, %s125
      %s129 = sphi 0, %s128
      %s145 = sphi 0, %s129
    $region4: #{tpu_custom_call.1} parent=1 // loop_header_branch
      %15 = sbr.rel (%p13) target = $region8
    $region5: #{tpu_custom_call.1} parent=1 // loop_body
      %s17 = ssub.s32 %s12, 1
      %s18 = ssub.s32 %s12, 2
      %s28 = sadd.s32 1, %s21
      %p29 = scmp.ge.s32.totalorder %s28, 1
      %s30 = scalar_select %p29, 0, %s28
      %s31 = sadd.s32 1, %s20
      %s32 = scalar_select %p29, %s31, %s20
      %p33 = scmp.ge.s32.totalorder %s32, 1
      %s34 = scalar_select %p33, 0, %s32
      %s35 = sadd.s32 1, %s19
      %s36 = scalar_select %p33, %s35, %s19
      %p37 = scmp.ge.s32.totalorder %s36, 2
      %s38 = scalar_select %p37, 0, %s36
      %s39 = ssub.s32 %s19, %s38
      %s40 = ssub.s32 %s20, %s34
      %s41 = sor.u32 %s39, %s40
      %p42 = scmp.eq.s32.totalorder %s41, 0
      %s44 = sadd.s32 %s43, 1
      %s45 = scalar_select %p42, %s43, %s44
      %p48 = pneg %p42
      %p49 = scmp.eq.s32.totalorder %s12, 1
      %p50 = por %p48, %p49
      %p51 = scmp.ne.s32.totalorder %s43, %s46
      %p52 = scmp.eq.s32.totalorder %s12, 0
      %p53 = por %p51, %p52
      %p54 = scmp.ne.s32.totalorder %s43, %s46
      %p55 = scmp.eq.s32.totalorder %s17, 1
      %p56 = por %p54, %p55
      %p57 = scmp.ne.s32.totalorder %s46, %s47
      %p58 = scmp.eq.s32.totalorder %s17, 0
      %p59 = por %p57, %p58
      %p60 = scmp.ne.s32.totalorder %s46, %s47
      %p61 = scmp.eq.s32.totalorder %s18, 1
      %p62 = por %p60, %p61
      %p64 = scmp.ne.s32.totalorder %s47, %s63
      %p65 = scmp.eq.s32.totalorder %s18, 0
      %p66 = por %p64, %p65
      %s67 = ssub.s32 %s21, %s30
      %p68 = scmp.eq.s32.totalorder %s67, 0
      %s70 = sadd.s32 %s69, 1
      %s71 = scalar_select %p68, %s69, %s70
      %p74 = pneg %p68
      %p75 = scmp.eq.s32.totalorder %s12, 1
      %p76 = por %p74, %p75
      %p77 = scmp.ne.s32.totalorder %s69, %s72
      %p78 = scmp.eq.s32.totalorder %s12, 0
      %p79 = por %p77, %p78
      %p80 = scmp.ne.s32.totalorder %s69, %s72
      %p81 = scmp.eq.s32.totalorder %s17, 1
      %p82 = por %p80, %p81
      %p83 = scmp.ne.s32.totalorder %s72, %s73
      %p84 = scmp.eq.s32.totalorder %s17, 0
      %p85 = por %p83, %p84
      %p86 = scmp.ne.s32.totalorder %s72, %s73
      %p87 = scmp.eq.s32.totalorder %s18, 1
      %p88 = por %p86, %p87
      %p90 = scmp.ne.s32.totalorder %s73, %s89
      %p91 = scmp.eq.s32.totalorder %s18, 0
      %p92 = por %p90, %p91
      %s93 = ssub.s32 %s21, %s30
      %p94 = scmp.eq.s32.totalorder %s93, 0
      %s96 = sadd.s32 %s95, 1
      %s97 = scalar_select %p94, %s95, %s96
      %p100 = pneg %p94
      %p101 = scmp.eq.s32.totalorder %s12, 1
      %p102 = por %p100, %p101
      %p103 = scmp.ne.s32.totalorder %s95, %s98
      %p104 = scmp.eq.s32.totalorder %s12, 0
      %p105 = por %p103, %p104
      %p106 = scmp.ne.s32.totalorder %s95, %s98
      %p107 = scmp.eq.s32.totalorder %s17, 1
      %p108 = por %p106, %p107
      %p109 = scmp.ne.s32.totalorder %s98, %s99
      %p110 = scmp.eq.s32.totalorder %s17, 0
      %p111 = por %p109, %p110
      %p112 = scmp.ne.s32.totalorder %s98, %s99
      %p113 = scmp.eq.s32.totalorder %s18, 1
      %p114 = por %p112, %p113
      %p116 = scmp.ne.s32.totalorder %s99, %s115
      %p117 = scmp.eq.s32.totalorder %s18, 0
      %p118 = por %p116, %p117
      %s119 = ssub.s32 %s19, %s38
      %s120 = ssub.s32 %s21, %s30
      %s121 = sor.u32 %s119, %s120
      %s122 = ssub.s32 %s20, %s34
      %s123 = sor.u32 %s121, %s122
      %p124 = scmp.eq.s32.totalorder %s123, 0
      %s126 = sadd.s32 %s125, 1
      %s127 = scalar_select %p124, %s125, %s126
      %p130 = pneg %p124
      %p131 = scmp.eq.s32.totalorder %s12, 1
      %p132 = por %p130, %p131
      %p133 = scmp.ne.s32.totalorder %s125, %s128
      %p134 = scmp.eq.s32.totalorder %s12, 0
      %p135 = por %p133, %p134
      %p136 = scmp.ne.s32.totalorder %s125, %s128
      %p137 = scmp.eq.s32.totalorder %s17, 1
      %p138 = por %p136, %p137
      %p139 = scmp.ne.s32.totalorder %s128, %s129
      %p140 = scmp.eq.s32.totalorder %s17, 0
      %p141 = por %p139, %p140
      %p142 = scmp.ne.s32.totalorder %s128, %s129
      %p143 = scmp.eq.s32.totalorder %s18, 1
      %p144 = por %p142, %p143
      %p146 = scmp.ne.s32.totalorder %s129, %s145
      %p147 = scmp.eq.s32.totalorder %s18, 0
      %p148 = por %p146, %p147
      %p149 = scmp.le.s32.totalorder 1, %s12
      %p150 = scmp.lt.s32.totalorder %s12, 3
      %p151 = pnand %p149, %p150
      %p152 = pneg %p151
      // Predicated region
      $region9: #{tpu_custom_call.1} parent=5 // pred_check
        _
      $region10: #{tpu_custom_call.1} parent=5 // pred_check_branch
        %154 = sbr.rel (%p151) target = $region12
      $region11: #{tpu_custom_call.1} parent=5 // pred_region
        %s155 = ssub.s32 %s12, 1
        // Predicated region
        $region13: #{tpu_custom_call.1} parent=11 // pred_check
          %p156 = pneg %p85
        $region14: #{tpu_custom_call.1} parent=11 // pred_check_branch
          %158 = sbr.rel (%p156) target = $region16
        $region15: #{tpu_custom_call.1} parent=11 // pred_region
          %p159 = scmp.lt.s32.totalorder %s24, 0
          %s160 = scalar_select %p159, %s24, 0
          %s161 = smul.addr %s160, 4
          %s162 = scalar_lea.vmem %s1, %s161
        $region16: #{tpu_custom_call.1} parent=11 // pred_fallthru
          _
        // Predicated region
        $region17: #{tpu_custom_call.1} parent=11 // pred_check
          %p163 = pneg %p111
        $region18: #{tpu_custom_call.1} parent=11 // pred_check_branch
          %165 = sbr.rel (%p163) target = $region20
        $region19: #{tpu_custom_call.1} parent=11 // pred_region
          %p166 = scmp.lt.s32.totalorder %s24, 0
          %s167 = scalar_select %p166, %s24, 0
          %s168 = smul.addr %s167, 8
          %s169 = scalar_lea.vmem %s2, %s168
        $region20: #{tpu_custom_call.1} parent=11 // pred_fallthru
          _
      $region12: #{tpu_custom_call.1} parent=5 // pred_fallthru
        _
      %p170 = scmp.lt.s32.totalorder %s12, 2
      // Predicated region
      $region21: #{tpu_custom_call.1} parent=5 // pred_check
        %p171 = pneg %p170
      $region22: #{tpu_custom_call.1} parent=5 // pred_check_branch
        %173 = sbr.rel (%p171) target = $region24
      $region23: #{tpu_custom_call.1} parent=5 // pred_region
        // Predicated region
        $region25: #{tpu_custom_call.1} parent=23 // pred_check
          %p174 = pneg %p53
        $region26: #{tpu_custom_call.1} parent=23 // pred_check_branch
          %176 = sbr.rel (%p174) target = $region28
        $region27: #{tpu_custom_call.1} parent=23 // pred_region
          %s177 = smul.u32 2, %s20
          %p178 = scmp.lt.s32.totalorder %s19, 1
          %s179 = scalar_select %p178, %s19, 1
          %p180 = scmp.lt.s32.totalorder %s177, 1
          %s181 = scalar_select %p180, %s177, 1
          %s182 = smul.addr %s179, 2
          %s183 = sadd.s32 %s181, %s182
          %s184 = smul.addr %s183, 2
          %s185 = scalar_lea.vmem %s0, %s184
          %s186 = smul.u32 2, %s20
        $region28: #{tpu_custom_call.1} parent=23 // pred_fallthru
          _
      $region24: #{tpu_custom_call.1} parent=5 // pred_fallthru
        _
      %p187 = scmp.le.s32.totalorder 1, %s12
      %p188 = scmp.lt.s32.totalorder %s12, 3
      %p189 = pnand %p187, %p188
      %p190 = pneg %p189
      // Predicated region
      $region29: #{tpu_custom_call.1} parent=5 // pred_check
        _
      $region30: #{tpu_custom_call.1} parent=5 // pred_check_branch
        %192 = sbr.rel (%p189) target = $region32
      $region31: #{tpu_custom_call.1} parent=5 // pred_region
        %s193 = ssub.s32 %s12, 1
        %s194 = smul.u32 2, %s23
        %p195 = scmp.lt.s32.totalorder %s22, 1
        %s196 = scalar_select %p195, %s22, 1
        %p197 = scmp.lt.s32.totalorder %s194, 1
        %s198 = scalar_select %p197, %s194, 1
        %s199 = smul.addr %s196, 2
        %s200 = sadd.s32 %s198, %s199
        %s201 = smul.addr %s200, 2
        %s202 = scalar_lea.vmem %s0, %s201
        %p203 = pneg %p59
        %p204 = pneg %p56
        %p205 = scmp.lt.s32.totalorder %s24, 0
        %s206 = scalar_select %p205, %s24, 0
        %s207 = smul.addr %s206, 4
        %s208 = scalar_lea.vmem %s1, %s207
        %p209 = pneg %p85
        %p210 = pneg %p82
        %p211 = scmp.lt.s32.totalorder %s24, 0
        %s212 = scalar_select %p211, %s24, 0
        %s213 = smul.addr %s212, 8
        %s214 = scalar_lea.vmem %s2, %s213
        %p215 = pneg %p111
        %p216 = pneg %p108
        %p217 = pneg %p141
        %p218 = pneg %p138
        %s219 = sand.u32 %s128, 1
        %s220 = scalar_lea.sflag [#allocation3], %s219
        %s221 = sand.u32 %s128, 1
        %s222 = smul.addr %s221, 16
        %s223 = scalar_lea.vmem [#allocation2], %s222
        %s224 = smul.u32 2, %s23
        %p225 = scmp.lt.s32.totalorder %s22, 1
        %s226 = scalar_select %p225, %s22, 1
        %p227 = scmp.lt.s32.totalorder %s224, 1
        %s228 = scalar_select %p227, %s224, 1
        %s229 = smul.addr %s226, 2
        %s230 = sadd.s32 %s228, %s229
        %s231 = smul.addr %s230, 2
        %s232 = scalar_lea.vmem %s0, %s231
        %s233 = smul.u32 2, %s23
        %p234 = scmp.lt.s32.totalorder %s24, 0
        %s235 = scalar_select %p234, %s24, 0
        %s236 = smul.addr %s235, 4
        %s237 = scalar_lea.vmem %s1, %s236
        %p238 = scmp.lt.s32.totalorder %s24, 0
        %s239 = scalar_select %p238, %s24, 0
        %s240 = smul.addr %s239, 8
        %s241 = scalar_lea.vmem %s2, %s240
        %s242 = smul.u32 2, %s23
        %v244 = vld [vmem:[%s237] sm:$0xf]
        %v245 = vld [vmem:[%s232] sm:$0xf]
        %v246 = vld [vmem:[%s241] sm:$0xff]
        %248 = vset.pattern.permute.xlu0 0
        %249 = vperm.xlu0 %248, %v246
        %v250 = vpop.permute.xlu0 %249
        %253 = vst [vmem:[#allocation1] ss:$4 sm:$0xff] %v245
        %v254 = vld.sshfl [vmem:[#allocation1] sm:$0xff pattern:$0x73625140]
        %v255 = vld.sshfl [vmem:[#allocation1 + $0x8] sm:$0xff pattern:$0x73625140]
        %vm256 = vcmask 31744
        %v258 = vsel %vm256, %v244, 0
        %vm260 = vcmask 1041408
        %v261 = vsel %vm260, %v254, 0
        %v263 = vsel %vm260, %v255, 0
        %265 = vmatpush.bf16.msra.mxu0 0
        %266 = vmatpush.bf16.msra.mxu0 0
        %267 = vmatpush.bf16.msra.mxu0 0
        %268 = vmatpush.bf16.msra.mxu0 0
        %269 = vmatpush.bf16.msra.mxu0 0
        %270 = vmatpush.bf16.msra.mxu0 0
        %271 = vmatpush.bf16.msra.mxu0 0
        %272 = vmatpush.bf16.msra.mxu0 %v261
        %273 = vmatmul.bf16.gmra.mxu0 %v258
        %v274 = vpop.f32.mrf.mxu0
        %v275 = vadd.f32 %v250, %v274
        %v276 = vpop.f32.mrf.mxu0
        %277 = vdwg.mxu0
        %278 = vmatpush.bf16.msra.mxu0 0
        %279 = vmatpush.bf16.msra.mxu0 0
        %280 = vmatpush.bf16.msra.mxu0 0
        %281 = vmatpush.bf16.msra.mxu0 0
        %282 = vmatpush.bf16.msra.mxu0 0
        %283 = vmatpush.bf16.msra.mxu0 0
        %284 = vmatpush.bf16.msra.mxu0 0
        %285 = vmatpush.bf16.msra.mxu0 %v263
        %286 = vmatmul.bf16.gmra.mxu0 %v258
        %v287 = vpop.f32.mrf.mxu0
        %v288 = vadd.f32 %v250, %v287
        %v289 = vpop.f32.mrf.mxu0
        %290 = vdwg.mxu0
        %v291 = vmax.f32 %v275, 0.0
        %v292 = vmax.f32 %v288, 0.0
        %293 = vst [vmem:[%s223] sm:$0xff] %v291
        %294 = vst [vmem:[%s223 + $0x8] sm:$0xff] %v292
        %s295 = sand.u32 %s128, 1
        %s296 = scalar_lea.sflag [#allocation3], %s295
        %s297 = sand.u32 %s128, 1
        %s298 = smul.addr %s297, 16
        %s299 = scalar_lea.vmem [#allocation2], %s298
        // Predicated region
        $region33: #{tpu_custom_call.1} parent=31 // pred_check
          %p300 = pneg %p138
        $region34: #{tpu_custom_call.1} parent=31 // pred_check_branch
          %302 = sbr.rel (%p300) target = $region36
        $region35: #{tpu_custom_call.1} parent=31 // pred_region
          %s303 = smul.u32 2, %s23
          %305 = vsyncadd %s296, 0
          %s306 = smul.addr %s24, 2
          %s307 = sadd.s32 %s303, %s306
          %s308 = smul.addr %s22, 2
          %s309 = sadd.s32 %s307, %s308
          %s310 = smul.addr %s309, 8
          %s311 = scalar_lea.hbm %s3, %s310
          %s313 = sshll.u32 %s299, 4
          %s314 = int_to_ptr.vmem [resolvable:$true] %s313
          %s315 = sshll.u32 %s311, 4
          %s316 = int_to_ptr.hbm [resolvable:$true] %s315
          %318 = dma.vmem_to_hbm [thread:$0]  %s314, 256, %s316, %s296
        $region36: #{tpu_custom_call.1} parent=31 // pred_fallthru
          _
      $region32: #{tpu_custom_call.1} parent=5 // pred_fallthru
        _
      %p319 = scmp.le.s32.totalorder 2, %s12
      // Predicated region
      $region37: #{tpu_custom_call.1} parent=5 // pred_check
        %p320 = pneg %p319
      $region38: #{tpu_custom_call.1} parent=5 // pred_check_branch
        %322 = sbr.rel (%p320) target = $region40
      $region39: #{tpu_custom_call.1} parent=5 // pred_region
        %s323 = ssub.s32 %s12, 2
        // Predicated region
        $region41: #{tpu_custom_call.1} parent=39 // pred_check
          %p324 = pneg %p144
        $region42: #{tpu_custom_call.1} parent=39 // pred_check_branch
          %326 = sbr.rel (%p324) target = $region44
        $region43: #{tpu_custom_call.1} parent=39 // pred_region
          %s327 = sand.u32 %s129, 1
          %s328 = scalar_lea.sflag [#allocation3], %s327
          %s329 = sand.u32 %s129, 1
          %s330 = smul.addr %s329, 16
          %s331 = scalar_lea.vmem [#allocation2], %s330
          %333 = dma.done %s328, 256
        $region44: #{tpu_custom_call.1} parent=39 // pred_fallthru
          _
      $region40: #{tpu_custom_call.1} parent=5 // pred_fallthru
        _
    $region6: #{tpu_custom_call.1} parent=1 // loop_footer
      %s16 = sadd.s32 1, %s12
    $region7: #{tpu_custom_call.1} parent=1 // loop_footer_branch
      %11 = sbr.rel target = $region3
    $region8: #{tpu_custom_call.1} parent=1 // loop_exit
      _
    %334 = vsyncpa [#allocation3], 1
    %s335 = scalar_lea.sflag [#allocation3], 1
    %336 = vsyncpa %s335, 1

</llo_original>
